<compile_context>
chip_gen: v5e
topology: v5e:2x2
jax: 0.10.0
libtpu: 0.0.40
codegen_flags: <defaults>
</compile_context>

<pallas_src>
import numpy as np
import jax
import jax.numpy as jnp
from jax.experimental import pallas as pl
from jax.experimental.pallas import tpu as pltpu


def _round_up(a, b):
    return (a + b - 1) // b * b


def _round_down(a, b):
    return (a // b) * b


# ----------------------------- Pallas kernel --------------------------------
def _shift2d_kernel(x_ref, y_ref, xc_ref, yc_ref, ih_ref, xh_ref, yh_ref):
    """Pure broadcast kernel, used in two layouts:

    points-on-lanes ("nm", small / ragged N):
        x_ref, y_ref : (1, TM)    xc/yc/ih : (Ns, 1)    xh/yh : (Ns, TM)
    nodes-on-lanes ("mn", N % 128 == 0):
        x_ref, y_ref : (TM, 1)    xc/yc/ih : (1, TN)    xh/yh : (TM, TN)
    """
    x = x_ref[...]
    y = y_ref[...]
    xc = xc_ref[...]
    yc = yc_ref[...]
    ih = ih_ref[...]          # 1/h precomputed in the wrapper (grid-invariant)
    xh_ref[...] = ((x - xc) * ih).astype(xh_ref.dtype)
    yh_ref[...] = ((y - yc) * ih).astype(yh_ref.dtype)


_VMEM_STEP_BUDGET = 24 * 1024 * 1024   # target double-buffered per-step bytes
_VMEM_LIMIT = 40 * 1024 * 1024         # < 64 MiB physical VMEM on v7x


def shift2d_forward(x, y, xc, yc, h, *, block_m=4096, out_dtype=jnp.float32,
                    transposed=False):
    """xh = (x - xc) / h, yh = (y - yc) / h.

    x, y : (M,) or (M, 1) evaluation coordinates.
    xc, yc : (N,) node centers;  h : scalar or (N,) node widths.
    Returns (xh, yh) of shape (M, N), or (N, M) if transposed=True
    (zero-copy kernel layout for fused downstream consumers; default matches
    the PyTorch module).  out_dtype=bfloat16 halves HBM write traffic when the
    downstream exp() tolerates it (default float32 keeps 1e-6 agreement).
    """
    x_flat = jnp.asarray(x, jnp.float32).reshape(-1)
    y_flat = jnp.asarray(y, jnp.float32).reshape(-1)
    M = int(x_flat.shape[0])
    N = int(xc.shape[0])
    itemsize = jnp.dtype(out_dtype).itemsize
    sub_mult = 8 * (4 // itemsize)           # sublane multiple for out_dtype

    xc = jnp.asarray(xc, jnp.float32).reshape(-1)
    yc = jnp.asarray(yc, jnp.float32).reshape(-1)
    # 1/h once in the wrapper (bit-identical to torch's `fac = 1.0/h` path);
    # removes a multi-op Newton divide from every grid step.
    inv_h = jnp.broadcast_to(1.0 / jnp.asarray(h, jnp.float32), (N,))

    use_mn = (N >= 128) and (N % 128 == 0)

    if use_mn:
        # ------- nodes on lanes: (M, N) output, 2-D grid, no padding --------
        tn = 512 if N % 512 == 0 else (256 if N % 256 == 0 else 128)
        # per-step VMEM: 2 bufs * [2 outputs (tm,tn) + x/y (tm,1) lane-padded
        # to (tm,128) f32 in VMEM]
        per_row = 2 * (2 * tn * itemsize + 2 * 128 * 4)
        tm = max(sub_mult, min(block_m, _VMEM_STEP_BUDGET // per_row))
        if tm >= M:
            tm = M                                    # full dim: always legal
        else:
            tm = max(sub_mult, _round_down(tm, sub_mult))
        grid = (pl.cdiv(M, tm), N // tn)
        out_shape = (jax.ShapeDtypeStruct((M, N), out_dtype),
                     jax.ShapeDtypeStruct((M, N), out_dtype))
        xh, yh = pl.pallas_call(
            _shift2d_kernel,
            out_shape=out_shape,
            grid=grid,
            in_specs=[
                pl.BlockSpec((tm, 1), lambda i, j: (i, 0)),   # x rows
                pl.BlockSpec((tm, 1), lambda i, j: (i, 0)),   # y rows
                pl.BlockSpec((1, tn), lambda i, j: (0, j)),   # xc
                pl.BlockSpec((1, tn), lambda i, j: (0, j)),   # yc
                pl.BlockSpec((1, tn), lambda i, j: (0, j)),   # 1/h
            ],
            out_specs=(
                pl.BlockSpec((tm, tn), lambda i, j: (i, j)),
                pl.BlockSpec((tm, tn), lambda i, j: (i, j)),
            ),
            compiler_params=pltpu.CompilerParams(
                dimension_semantics=("parallel", "parallel"),
                vmem_limit_bytes=_VMEM_LIMIT),
        )(x_flat.reshape(-1, 1), y_flat.reshape(-1, 1),
          xc.reshape(1, -1), yc.reshape(1, -1), inv_h.reshape(1, -1))
        if transposed:
            return xh.T, yh.T
        return xh, yh

    # ---------- small / ragged N: points on lanes, nodes on sublanes ---------
    ns = _round_up(max(N, 1), sub_mult)
    xc_col = jnp.zeros((ns, 1), jnp.float32).at[:N, 0].set(xc)
    yc_col = jnp.zeros((ns, 1), jnp.float32).at[:N, 0].set(yc)
    ih_col = jnp.zeros((ns, 1), jnp.float32).at[:N, 0].set(inv_h)  # pad -> 0.0

    # per-step VMEM: 2 bufs * [2 outputs (ns,tm) + x/y (1,tm) sublane-padded
    # to (8,tm) f32 in VMEM]
    per_col = 2 * (2 * ns * itemsize + 2 * 8 * 4)
    tm = max(128, min(block_m, _VMEM_STEP_BUDGET // per_col))
    if tm >= M:
        tm = M                                        # full dim: always legal
    else:
        tm = max(128, _round_down(tm, 128))           # lane-dense, unmasked vst
    grid = (pl.cdiv(M, tm),)
    out_shape = (jax.ShapeDtypeStruct((ns, M), out_dtype),
                 jax.ShapeDtypeStruct((ns, M), out_dtype))
    xh_t, yh_t = pl.pallas_call(
        _shift2d_kernel,
        out_shape=out_shape,
        grid=grid,
        in_specs=[
            pl.BlockSpec((1, tm), lambda i: (0, i)),          # x, lane-dense
            pl.BlockSpec((1, tm), lambda i: (0, i)),          # y, lane-dense
            pl.BlockSpec((ns, 1), lambda i: (0, 0)),          # xc resident
            pl.BlockSpec((ns, 1), lambda i: (0, 0)),          # yc resident
            pl.BlockSpec((ns, 1), lambda i: (0, 0)),          # 1/h resident
        ],
        out_specs=(
            pl.BlockSpec((ns, tm), lambda i: (0, i)),
            pl.BlockSpec((ns, tm), lambda i: (0, i)),
        ),
        compiler_params=pltpu.CompilerParams(
            dimension_semantics=("parallel",),
            vmem_limit_bytes=_VMEM_LIMIT),
    )(x_flat.reshape(1, -1), y_flat.reshape(1, -1), xc_col, yc_col, ih_col)

    if transposed:
        return xh_t[:N, :], yh_t[:N, :]
    # TODO(synk): prefer transposed=True + fused RBF exp downstream so neither
    # this transpose nor the (M, N) intermediates are ever materialized.
    return xh_t[:N, :].T, yh_t[:N, :].T


# ------------------------- Module-equivalent wrapper -------------------------
class Shift2DPallas:
    """JAX/Pallas equivalent of the PyTorch Shift2D module (forward only)."""

    def __init__(self, points, fixed_points, fixed_h=False):
        px, py = (jnp.asarray(points[0], jnp.float32),
                  jnp.asarray(points[1], jnp.float32))
        fx, fy = (jnp.asarray(fixed_points[0], jnp.float32),
                  jnp.asarray(fixed_points[1], jnp.float32))
        n_free = px.shape[0]
        n_fixed = fx.shape[0]
        self.n = n = n_free + n_fixed
        if n_fixed:
            dsize = float(np.ptp(np.hstack((np.asarray(px), np.asarray(fx)))))
        else:
            dsize = float(np.ptp(np.asarray(px)))
        dx = dsize / np.sqrt(n)
        self.dx = dx
        self.x = px
        self.y = py
        self.xf = fx
        self.yf = fy
        self.fixed_h = fixed_h
        if fixed_h:
            self.h = jnp.asarray(dx, jnp.float32)
        else:
            self.h = dx * jnp.ones(n, jnp.float32)

    def centers(self):
        return (jnp.concatenate((self.x, self.xf)),
                jnp.concatenate((self.y, self.yf)))

    def widths(self):
        if self.fixed_h:
            return self.h * jnp.ones(self.n, jnp.float32)
        return self.h

    def forward(self, x, y, *, transposed=False):
        xc, yc = self.centers()
        return shift2d_forward(x, y, xc, yc, self.h, transposed=transposed)


# ----------------------------------- main ------------------------------------
if __name__ == "__main__":
    key = jax.random.PRNGKey(0)
    k = jax.random.split(key, 12)

    # ---------------- Test 1: SPINN-sized case (N=16, M=300) ----------------
    n_free, n_fixed = 12, 4          # n = 16 RBF nodes
    M = 300                          # evaluation points (non-multiple of 8/128)
    points = (jax.random.uniform(k[0], (n_free,), jnp.float32),
              jax.random.uniform(k[1], (n_free,), jnp.float32))
    fixed_points = (jax.random.uniform(k[2], (n_fixed,), jnp.float32),
                    jax.random.uniform(k[3], (n_fixed,), jnp.float32))
    module = Shift2DPallas(points, fixed_points, fixed_h=False)

    x_in = jax.random.uniform(k[4], (M, 1), jnp.float32)
    y_in = jax.random.uniform(k[5], (M, 1), jnp.float32)

    xh, yh = module.forward(x_in, y_in)
    jax.block_until_ready((xh, yh))

    xc, yc = module.centers()
    fac = 1.0 / module.h
    xh_ref = (x_in - xc) * fac
    yh_ref = (y_in - yc) * fac
    assert xh.shape == (M, module.n) and yh.shape == (M, module.n)
    np.testing.assert_allclose(np.asarray(xh), np.asarray(xh_ref),
                               rtol=1e-6, atol=1e-6)
    np.testing.assert_allclose(np.asarray(yh), np.asarray(yh_ref),
                               rtol=1e-6, atol=1e-6)

    # ---------------- Test 2: fixed_h (scalar width) -------------------------
    module_fh = Shift2DPallas(points, fixed_points, fixed_h=True)
    xh2, yh2 = module_fh.forward(x_in, y_in)
    jax.block_until_ready((xh2, yh2))
    xc2, yc2 = module_fh.centers()
    fac2 = 1.0 / module_fh.h
    np.testing.assert_allclose(np.asarray(xh2), np.asarray((x_in - xc2) * fac2),
                               rtol=1e-6, atol=1e-6)
    np.testing.assert_allclose(np.asarray(yh2), np.asarray((y_in - yc2) * fac2),
                               rtol=1e-6, atol=1e-6)

    # ------------- Test 3: multi-step pipelined grid + transposed out --------
    M3 = 384
    x3 = jax.random.uniform(k[6], (M3,), jnp.float32)
    y3 = jax.random.uniform(k[7], (M3,), jnp.float32)
    xh3, yh3 = shift2d_forward(x3, y3, xc, yc, module.h, block_m=128)
    xh3t, yh3t = shift2d_forward(x3, y3, xc, yc, module.h, block_m=128,
                                 transposed=True)
    jax.block_until_ready((xh3, yh3, xh3t, yh3t))
    xh3_ref = (x3[:, None] - xc[None, :]) * fac[None, :]
    yh3_ref = (y3[:, None] - yc[None, :]) * fac[None, :]
    np.testing.assert_allclose(np.asarray(xh3), np.asarray(xh3_ref),
                               rtol=1e-6, atol=1e-6)
    np.testing.assert_allclose(np.asarray(yh3), np.asarray(yh3_ref),
                               rtol=1e-6, atol=1e-6)
    np.testing.assert_allclose(np.asarray(xh3t), np.asarray(xh3_ref.T),
                               rtol=1e-6, atol=1e-6)
    np.testing.assert_allclose(np.asarray(yh3t), np.asarray(yh3_ref.T),
                               rtol=1e-6, atol=1e-6)

    # ------------- Test 4: wide node set -> lane-dense (M, N) path -----------
    N4, M4 = 384, 304
    xc4 = jax.random.uniform(k[8], (N4,), jnp.float32)
    yc4 = jax.random.uniform(k[9], (N4,), jnp.float32)
    h4 = 0.5 + jax.random.uniform(k[10], (N4,), jnp.float32)
    x4 = jax.random.uniform(k[11], (M4,), jnp.float32)
    y4 = jax.random.uniform(k[0], (M4,), jnp.float32)
    xh4, yh4 = shift2d_forward(x4, y4, xc4, yc4, h4)
    jax.block_until_ready((xh4, yh4))
    inv_h4 = 1.0 / h4
    np.testing.assert_allclose(
        np.asarray(xh4), np.asarray((x4[:, None] - xc4[None, :]) * inv_h4),
        rtol=1e-6, atol=1e-6)
    np.testing.assert_allclose(
        np.asarray(yh4), np.asarray((y4[:, None] - yc4[None, :]) * inv_h4),
        rtol=1e-6, atol=1e-6)

    print("KERNEL_OK")
</pallas_src>

<mosaic_0001>
module attributes {stable_mosaic.version = 11 : i64} {
  func.func @_shift2d_kernel(%arg0: i32, %arg1: memref<1x300xf32, #tpu.memory_space<vmem>>, %arg2: memref<1x300xf32, #tpu.memory_space<vmem>>, %arg3: memref<16x1xf32, #tpu.memory_space<vmem>>, %arg4: memref<16x1xf32, #tpu.memory_space<vmem>>, %arg5: memref<16x1xf32, #tpu.memory_space<vmem>>, %arg6: memref<16x300xf32, #tpu.memory_space<vmem>>, %arg7: memref<16x300xf32, #tpu.memory_space<vmem>>) attributes {dimension_semantics = [#tpu.dimension_semantics<parallel>], iteration_bounds = array<i64: 1>, scalar_prefetch = 0 : i64, scratch_operands = 0 : i64, tpu.core_type = #tpu.core_type<tc>, window_params = [{transform_indices = @transform_0, window_bounds = array<i64: 1, 300>}, {transform_indices = @transform_1, window_bounds = array<i64: 1, 300>}, {pipeline_mode = #tpu.pipeline_mode<synchronous>, transform_indices = @transform_2, window_bounds = array<i64: 16, 1>}, {pipeline_mode = #tpu.pipeline_mode<synchronous>, transform_indices = @transform_3, window_bounds = array<i64: 16, 1>}, {pipeline_mode = #tpu.pipeline_mode<synchronous>, transform_indices = @transform_4, window_bounds = array<i64: 16, 1>}, {transform_indices = @transform_5, window_bounds = array<i64: 16, 300>}, {transform_indices = @transform_6, window_bounds = array<i64: 16, 300>}]} {
    %c0 = arith.constant 0 : index
    %c0_0 = arith.constant 0 : index
    %0 = vector.load %arg1[%c0, %c0_0] : memref<1x300xf32, #tpu.memory_space<vmem>>, vector<1x300xf32>
    %c0_1 = arith.constant 0 : index
    %c0_2 = arith.constant 0 : index
    %1 = vector.load %arg2[%c0_1, %c0_2] : memref<1x300xf32, #tpu.memory_space<vmem>>, vector<1x300xf32>
    %c0_3 = arith.constant 0 : index
    %c0_4 = arith.constant 0 : index
    %2 = vector.load %arg3[%c0_3, %c0_4] : memref<16x1xf32, #tpu.memory_space<vmem>>, vector<16x1xf32>
    %c0_5 = arith.constant 0 : index
    %c0_6 = arith.constant 0 : index
    %3 = vector.load %arg4[%c0_5, %c0_6] : memref<16x1xf32, #tpu.memory_space<vmem>>, vector<16x1xf32>
    %c0_7 = arith.constant 0 : index
    %c0_8 = arith.constant 0 : index
    %4 = vector.load %arg5[%c0_7, %c0_8] : memref<16x1xf32, #tpu.memory_space<vmem>>, vector<16x1xf32>
    %5 = vector.broadcast %0 : vector<1x300xf32> to vector<16x300xf32>
    %6 = vector.broadcast %2 : vector<16x1xf32> to vector<16x300xf32>
    %7 = arith.subf %5, %6 : vector<16x300xf32>
    %8 = vector.broadcast %4 : vector<16x1xf32> to vector<16x300xf32>
    %9 = arith.mulf %7, %8 : vector<16x300xf32>
    %c0_9 = arith.constant 0 : index
    %c0_10 = arith.constant 0 : index
    %10 = vector.load %arg6[%c0_9, %c0_10] : memref<16x300xf32, #tpu.memory_space<vmem>>, vector<16x300xf32>
    tpu.vector_store %arg6[%c0_9, %c0_10], %9 {strides = array<i32>} : memref<16x300xf32, #tpu.memory_space<vmem>>, vector<16x300xf32>,
    %11 = vector.broadcast %1 : vector<1x300xf32> to vector<16x300xf32>
    %12 = vector.broadcast %3 : vector<16x1xf32> to vector<16x300xf32>
    %13 = arith.subf %11, %12 : vector<16x300xf32>
    %14 = vector.broadcast %4 : vector<16x1xf32> to vector<16x300xf32>
    %15 = arith.mulf %13, %14 : vector<16x300xf32>
    %c0_11 = arith.constant 0 : index
    %c0_12 = arith.constant 0 : index
    %16 = vector.load %arg7[%c0_11, %c0_12] : memref<16x300xf32, #tpu.memory_space<vmem>>, vector<16x300xf32>
    tpu.vector_store %arg7[%c0_11, %c0_12], %15 {strides = array<i32>} : memref<16x300xf32, #tpu.memory_space<vmem>>, vector<16x300xf32>,
    return
  }
  func.func @transform_0(%arg0: i32) -> (i32, i32) {
    %c0_i32 = arith.constant 0 : i32
    %c0_i32_0 = arith.constant 0 : i32
    return %c0_i32, %arg0 : i32, i32
  }
  func.func @transform_1(%arg0: i32) -> (i32, i32) {
    %c0_i32 = arith.constant 0 : i32
    %c0_i32_0 = arith.constant 0 : i32
    return %c0_i32, %arg0 : i32, i32
  }
  func.func @transform_2(%arg0: i32) -> (i32, i32) {
    %c0_i32 = arith.constant 0 : i32
    %c0_i32_0 = arith.constant 0 : i32
    %c0_i32_1 = arith.constant 0 : i32
    return %c0_i32, %c0_i32_0 : i32, i32
  }
  func.func @transform_3(%arg0: i32) -> (i32, i32) {
    %c0_i32 = arith.constant 0 : i32
    %c0_i32_0 = arith.constant 0 : i32
    %c0_i32_1 = arith.constant 0 : i32
    return %c0_i32, %c0_i32_0 : i32, i32
  }
  func.func @transform_4(%arg0: i32) -> (i32, i32) {
    %c0_i32 = arith.constant 0 : i32
    %c0_i32_0 = arith.constant 0 : i32
    %c0_i32_1 = arith.constant 0 : i32
    return %c0_i32, %c0_i32_0 : i32, i32
  }
  func.func @transform_5(%arg0: i32) -> (i32, i32) {
    %c0_i32 = arith.constant 0 : i32
    %c0_i32_0 = arith.constant 0 : i32
    return %c0_i32, %arg0 : i32, i32
  }
  func.func @transform_6(%arg0: i32) -> (i32, i32) {
    %c0_i32 = arith.constant 0 : i32
    %c0_i32_0 = arith.constant 0 : i32
    return %c0_i32, %arg0 : i32, i32
  }
}

</mosaic_0001>

<llo_original>
// kernel: tpu_custom_call.1
$region0: #{tpu_custom_call.1}
  #allocation0 [shape = 'u32[]', space=smem, size = 0x4, offset = 0x4, fixed_abs, tag = 'smem constant byte address 0x4 - core index']
  #allocation1 [shape = 'u32[72,128]{1,0:T(1,128)}', space=vmem, size = 0x9000, scoped, tag = 'internal scratch']
  %s0 = inlined_call_operand.vmem [shape: f32[1,300], index: 0, kind: input, shape index: {}]
  %s1 = inlined_call_operand.vmem [shape: f32[1,300], index: 1, kind: input, shape index: {}]
  %s2 = inlined_call_operand.vmem [shape: f32[16,1], index: 2, kind: input, shape index: {}]
  %s3 = inlined_call_operand.vmem [shape: f32[16,1], index: 3, kind: input, shape index: {}]
  %s4 = inlined_call_operand.vmem [shape: f32[16,1], index: 4, kind: input, shape index: {}]
  %s5 = inlined_call_operand.hbm [shape: f32[16,300], index: 5, kind: output, shape index: {0}]
  %s6 = inlined_call_operand.hbm [shape: f32[16,300], index: 6, kind: output, shape index: {1}]
  %7 = xla_tuple %s5, %s6
  %s8 = sld [smem:[#allocation0]]
  $region38: #{tpu_custom_call.1} parent=0
    _
  %s10 = ssub.s32 1, %s8
  %s11 = scalar_select 0, %s10, %s8
  $region1: #{tpu_custom_call.1} parent=0
    #allocation2 [shape = 'u8[24576]{0}', space=vmem, size = 0x6000, scoped, tag = 'output window, operand 0, single buffered']
    #allocation3 [shape = 's32[1]{0}', space=sflag, size = 0x4, scoped, tag = 'scoped memory for tpu_custom_call.1']
    #allocation4 [shape = 'u8[24576]{0}', space=vmem, size = 0x6000, scoped, tag = 'output window, operand 1, single buffered']
    #allocation5 [shape = 's32[1]{0}', space=sflag, size = 0x4, scoped, tag = 'scoped memory for tpu_custom_call.1']
    %12 = vsyncpa [#allocation3], 0
    %13 = vsyncpa [#allocation5], 0
    // Predicated region
    $region2: #{tpu_custom_call.1} parent=1 // pred_check
      _
    $region3: #{tpu_custom_call.1} parent=1 // pred_check_branch
      %15 = sbr.rel (0) target = $region5
    $region4: #{tpu_custom_call.1} parent=1 // pred_region
      _
    $region5: #{tpu_custom_call.1} parent=1 // pred_fallthru
      _
    // Predicated region
    $region6: #{tpu_custom_call.1} parent=1 // pred_check
      _
    $region7: #{tpu_custom_call.1} parent=1 // pred_check_branch
      %17 = sbr.rel (0) target = $region9
    $region8: #{tpu_custom_call.1} parent=1 // pred_region
      _
    $region9: #{tpu_custom_call.1} parent=1 // pred_fallthru
      _
    // Predicated region
    $region10: #{tpu_custom_call.1} parent=1 // pred_check
      _
    $region11: #{tpu_custom_call.1} parent=1 // pred_check_branch
      %19 = sbr.rel (0) target = $region13
    $region12: #{tpu_custom_call.1} parent=1 // pred_region
      _
    $region13: #{tpu_custom_call.1} parent=1 // pred_fallthru
      _
    // Predicated region
    $region14: #{tpu_custom_call.1} parent=1 // pred_check
      _
    $region15: #{tpu_custom_call.1} parent=1 // pred_check_branch
      %21 = sbr.rel (0) target = $region17
    $region16: #{tpu_custom_call.1} parent=1 // pred_region
      _
    $region17: #{tpu_custom_call.1} parent=1 // pred_fallthru
      _
    // Predicated region
    $region18: #{tpu_custom_call.1} parent=1 // pred_check
      _
    $region19: #{tpu_custom_call.1} parent=1 // pred_check_branch
      %23 = sbr.rel (0) target = $region21
    $region20: #{tpu_custom_call.1} parent=1 // pred_region
      _
    $region21: #{tpu_custom_call.1} parent=1 // pred_fallthru
      _
    %v24 = vld [vmem:[%s0] sm:$0x7]
    %v25 = vld [vmem:[%s1] sm:$0x7]
    %v26 = vld [vmem:[%s2] sm:$0xff]
    %v27 = vld [vmem:[%s2 + $0x8] sm:$0xff]
    %v28 = vld [vmem:[%s3] sm:$0xff]
    %v29 = vld [vmem:[%s3 + $0x8] sm:$0xff]
    %v30 = vld [vmem:[%s4] sm:$0xff]
    %v31 = vld [vmem:[%s4 + $0x8] sm:$0xff]
    %v33 = vperm.slane %v24, 0
    %v34 = vperm.slane %v24, 1
    %v35 = vperm.slane %v24, 2
    %40 = vset.pattern.permute.xlu0 0
    %41 = vperm.xlu0 %40, %v26
    %v42 = vpop.permute.xlu0 %41
    %45 = vset.pattern.permute.xlu0 0
    %46 = vperm.xlu0 %45, %v27
    %v47 = vpop.permute.xlu0 %46
    %v49 = vsub.f32 %v33, %v42
    %v50 = vsub.f32 %v34, %v42
    %v51 = vsub.f32 %v35, %v42
    %v52 = vsub.f32 %v33, %v47
    %v53 = vsub.f32 %v34, %v47
    %v54 = vsub.f32 %v35, %v47
    %56 = vset.pattern.permute.xlu0 0
    %57 = vperm.xlu0 %56, %v30
    %v58 = vpop.permute.xlu0 %57
    %61 = vset.pattern.permute.xlu0 0
    %62 = vperm.xlu0 %61, %v31
    %v63 = vpop.permute.xlu0 %62
    %v65 = vmul.f32 %v49, %v58
    %v66 = vmul.f32 %v50, %v58
    %v67 = vmul.f32 %v51, %v58
    %v68 = vmul.f32 %v52, %v63
    %v69 = vmul.f32 %v53, %v63
    %v70 = vmul.f32 %v54, %v63
    %71 = vst [vmem:[#allocation2] sm:$0xff] %v65
    %72 = vst [vmem:[#allocation2 + $0x8] sm:$0xff] %v66
    %vm73 = vcmask 359424
    %74 = vst.msk [vmem:[#allocation2 + $0x10] sm:$0xff] %vm73, %v67
    %75 = vst [vmem:[#allocation2 + $0x18] sm:$0xff] %v68
    %76 = vst [vmem:[#allocation2 + $0x20] sm:$0xff] %v69
    %77 = vst.msk [vmem:[#allocation2 + $0x28] sm:$0xff] %vm73, %v70
    %v79 = vperm.slane %v25, 0
    %v80 = vperm.slane %v25, 1
    %v81 = vperm.slane %v25, 2
    %86 = vset.pattern.permute.xlu0 0
    %87 = vperm.xlu0 %86, %v28
    %v88 = vpop.permute.xlu0 %87
    %91 = vset.pattern.permute.xlu0 0
    %92 = vperm.xlu0 %91, %v29
    %v93 = vpop.permute.xlu0 %92
    %v95 = vsub.f32 %v79, %v88
    %v96 = vsub.f32 %v80, %v88
    %v97 = vsub.f32 %v81, %v88
    %v98 = vsub.f32 %v79, %v93
    %v99 = vsub.f32 %v80, %v93
    %v100 = vsub.f32 %v81, %v93
    %v101 = vmul.f32 %v95, %v58
    %v102 = vmul.f32 %v96, %v58
    %v103 = vmul.f32 %v97, %v58
    %v104 = vmul.f32 %v98, %v63
    %v105 = vmul.f32 %v99, %v63
    %v106 = vmul.f32 %v100, %v63
    %107 = vst [vmem:[#allocation4] sm:$0xff] %v101
    %108 = vst [vmem:[#allocation4 + $0x8] sm:$0xff] %v102
    %109 = vst.msk [vmem:[#allocation4 + $0x10] sm:$0xff] %vm73, %v103
    %110 = vst [vmem:[#allocation4 + $0x18] sm:$0xff] %v104
    %111 = vst [vmem:[#allocation4 + $0x20] sm:$0xff] %v105
    %112 = vst.msk [vmem:[#allocation4 + $0x28] sm:$0xff] %vm73, %v106
    // Predicated region
    $region22: #{tpu_custom_call.1} parent=1 // pred_check
      _
    $region23: #{tpu_custom_call.1} parent=1 // pred_check_branch
      %114 = sbr.rel (0) target = $region25
    $region24: #{tpu_custom_call.1} parent=1 // pred_region
      %116 = vsyncadd [#allocation3], 0
      %s117 = sshll.u32 [#allocation2], 4
      %s118 = int_to_ptr.vmem [resolvable:$true] %s117
      %s119 = sshll.u32 %s5, 4
      %s120 = int_to_ptr.hbm [resolvable:$true] %s119
      %125 = dma.vmem_to_hbm [thread:$0]  %s118, 768, %s120, [#allocation3], 384, 384, 24
    $region25: #{tpu_custom_call.1} parent=1 // pred_fallthru
      _
    // Predicated region
    $region26: #{tpu_custom_call.1} parent=1 // pred_check
      _
    $region27: #{tpu_custom_call.1} parent=1 // pred_check_branch
      %127 = sbr.rel (0) target = $region29
    $region28: #{tpu_custom_call.1} parent=1 // pred_region
      %129 = vsyncadd [#allocation5], 0
      %s130 = sshll.u32 [#allocation4], 4
      %s131 = int_to_ptr.vmem [resolvable:$true] %s130
      %s132 = sshll.u32 %s6, 4
      %s133 = int_to_ptr.hbm [resolvable:$true] %s132
      %138 = dma.vmem_to_hbm [thread:$0]  %s131, 768, %s133, [#allocation5], 384, 384, 24
    $region29: #{tpu_custom_call.1} parent=1 // pred_fallthru
      _
    // Predicated region
    $region30: #{tpu_custom_call.1} parent=1 // pred_check
      _
    $region31: #{tpu_custom_call.1} parent=1 // pred_check_branch
      %140 = sbr.rel (0) target = $region33
    $region32: #{tpu_custom_call.1} parent=1 // pred_region
      %142 = dma.done [#allocation3], 768
    $region33: #{tpu_custom_call.1} parent=1 // pred_fallthru
      _
    // Predicated region
    $region34: #{tpu_custom_call.1} parent=1 // pred_check
      _
    $region35: #{tpu_custom_call.1} parent=1 // pred_check_branch
      %144 = sbr.rel (0) target = $region37
    $region36: #{tpu_custom_call.1} parent=1 // pred_region
      %146 = dma.done [#allocation5], 768
    $region37: #{tpu_custom_call.1} parent=1 // pred_fallthru
      _
    %147 = vsyncpa [#allocation3], 1
    %148 = vsyncpa [#allocation5], 1

</llo_original>
